<compile_context>
chip_gen: v7x
topology: tpu7x:2x2x1
jax: 0.10.0
libtpu: 0.0.40
codegen_flags: <defaults>
</compile_context>

<pallas_src>
import functools
import math

import jax
import jax.numpy as jnp
from jax.experimental import pallas as pl
from jax.experimental.pallas import tpu as pltpu


# ----------------------------------------------------------------------------
# Kernel
# ----------------------------------------------------------------------------
def msa_kernel(x_ref, wq_ref, bq_ref, wk_ref, bk_ref, wv_ref, bv_ref, o_ref, *, n_heads):
    Bt, S, D = x_ref.shape
    H = n_heads
    dh = D // H
    n = Bt * S

    # Lane-dense activation block; bf16 MXU operands, f32 accumulation everywhere.
    x = x_ref[...].reshape(n, D)                                   # bf16 (cast in wrapper)

    def proj(w_ref, b_ref):
        y = jnp.dot(x, w_ref[...], preferred_element_type=jnp.float32)
        return y + b_ref[...]                                      # bias: (1, D) f32

    # Block-diagonal weights: one D x D matmul covers all heads.  1/sqrt(dh) is already
    # folded into wq / bq in the wrapper.
    q = proj(wq_ref, bq_ref)                                       # (n, D) f32
    k = proj(wk_ref, bk_ref)
    v = proj(wv_ref, bv_ref)

    def split_heads(t):
        # (n, D) -> (H*Bt, S, dh) head-major streams.  Static lane slices unrolled over
        # the small head count + leading-dim reshapes only; compute stays batched below.
        parts = [
            t[:, h * dh:(h + 1) * dh].astype(jnp.bfloat16).reshape(Bt, S, dh)
            for h in range(H)
        ]
        return jnp.stack(parts, axis=0).reshape(H * Bt, S, dh)

    qh = split_heads(q)
    kh = split_heads(k)
    vh = split_heads(v)

    # Batched attention over the fused (head, batch-tile) axis.
    s = jnp.einsum('nqd,nkd->nqk', qh, kh,
                   preferred_element_type=jnp.float32)             # (H*Bt, S, S)
    s = s - jnp.max(s, axis=-1, keepdims=True)                     # stable softmax
    p = jnp.exp(s)
    denom = jnp.sum(p, axis=-1, keepdims=True)                     # (H*Bt, S, 1), >= 1

    o = jnp.einsum('nqk,nkd->nqd', p.astype(jnp.bfloat16), vh,
                   preferred_element_type=jnp.float32)             # (H*Bt, S, dh)
    # Normalize the (S, dh) output, not the (S, S) matrix; exact reciprocal (denom >= 1).
    o = o * pl.reciprocal(denom, approx=False)
    o = o.reshape(H, Bt, S, dh)

    # Merge heads back into the channel-dense (Bt, S, D) block.  These are cheap static
    # VMEM lane-slice stores; the HBM writeback of the block stays one dense DMA.
    for h in range(H):
        o_ref[:, :, h * dh:(h + 1) * dh] = o[h].astype(o_ref.dtype)


# ----------------------------------------------------------------------------
# Wrapper
# ----------------------------------------------------------------------------
def my_msa(x, params, n_heads: int):
    B, S, D = x.shape
    H = n_heads
    assert D % H == 0
    dh = D // H
    scale = 1.0 / math.sqrt(dh)
    out_bytes = jnp.dtype(x.dtype).itemsize

    # PyTorch nn.Linear stores (out, in); y = x @ W.T + b.  Build (in, out) per-head
    # blocks and place them on a (D, D) block-diagonal.  Fold the softmax scale into
    # wq / bq once here (one-time weight transform, not a per-call activation pass).
    def block_diag(w_heads):                                        # (H, dh, dh)
        w = jnp.transpose(w_heads, (0, 2, 1))                       # per-head (in, out)
        eye = jnp.eye(H, dtype=w.dtype)
        return jnp.einsum('hio,hg->higo', w, eye).reshape(D, D)     # block h on diagonal

    wq = (block_diag(params["wq"]) * scale).astype(jnp.bfloat16)
    wk = block_diag(params["wk"]).astype(jnp.bfloat16)
    wv = block_diag(params["wv"]).astype(jnp.bfloat16)
    bq = (params["bq"].reshape(1, D) * scale).astype(jnp.float32)
    bk = params["bk"].reshape(1, D).astype(jnp.float32)
    bv = params["bv"].reshape(1, D).astype(jnp.float32)

    # bf16 input DMA (no layout transpose needed: kernel consumes (B, S, D) directly).
    x_bf = x.astype(jnp.bfloat16)

    # --- VMEM-aware batch-tile selection -------------------------------------------
    def _r(a, m):
        return ((a + m - 1) // m) * m

    def vmem_bytes(bt):
        Dp, dhp, Sp = _r(D, 128), _r(dh, 128), _r(S, 128)
        S8, n8 = _r(S, 8), _r(bt * S, 8)
        blocks = 2 * bt * S8 * Dp * 2 + 2 * bt * S8 * Dp * out_bytes     # x / o (double-buffered)
        weights = 2 * 3 * (_r(D, 8) * Dp * 2 + 8 * Dp * 4)               # wq/wk/wv + biases
        interm = (3 * n8 * Dp * 4                                        # q, k, v (f32)
                  + 3 * H * bt * S8 * dhp * 2                            # bf16 head-split copies
                  + 2 * H * bt * S8 * Sp * 4                             # s, p (f32)
                  + H * bt * S8 * dhp * 4)                               # o (f32)
        return blocks + weights + interm

    BUDGET = 40 * 1024 * 1024            # conservative: fits v7x's 64 MiB physical VMEM
    divisors = [d for d in range(1, B + 1) if B % d == 0]
    fitting = [d for d in divisors if vmem_bytes(d) <= BUDGET] or [1]
    multi_step = [d for d in fitting if B // d >= 2]   # feed both v7x TCs when batch allows
    bt = max(multi_step) if multi_step else max(fitting)
    grid = (B // bt,)

    vmem_limit = min(48 * 1024 * 1024,
                     max(int(vmem_bytes(bt) * 1.25), 16 * 1024 * 1024))

    # --- BlockSpecs -------------------------------------------------------------------
    const2 = lambda b: (0, 0)
    in_specs = [
        pl.BlockSpec((bt, S, D), lambda b: (b, 0, 0)),              # x (lane-dense, D last)
        pl.BlockSpec((D, D), const2), pl.BlockSpec((1, D), const2),  # wq, bq (VMEM-resident)
        pl.BlockSpec((D, D), const2), pl.BlockSpec((1, D), const2),  # wk, bk
        pl.BlockSpec((D, D), const2), pl.BlockSpec((1, D), const2),  # wv, bv
    ]
    out_spec = pl.BlockSpec((bt, S, D), lambda b: (b, 0, 0))        # lane-dense output

    flops = B * (3 * 2 * S * D * D) + B * H * (2 * 2 * S * S * dh)
    cost = pl.CostEstimate(
        flops=flops,
        transcendentals=B * H * S * S,
        bytes_accessed=B * S * D * 2 + B * S * D * out_bytes + 3 * D * D * 2 + 3 * D * 4,
    )

    kernel = functools.partial(msa_kernel, n_heads=H)
    out = pl.pallas_call(
        kernel,
        out_shape=jax.ShapeDtypeStruct((B, S, D), x.dtype),
        grid=grid,
        in_specs=in_specs,
        out_specs=out_spec,
        compiler_params=pltpu.CompilerParams(
            dimension_semantics=("parallel",),
            vmem_limit_bytes=vmem_limit,
        ),
        cost_estimate=cost,
    )(x_bf, wq, bq, wk, bk, wv, bv)
    return out


# ----------------------------------------------------------------------------
# Deterministic parameter init (mirrors MyMSA.__init__ shapes)
# ----------------------------------------------------------------------------
def init_params(key, d, n_heads):
    dh = d // n_heads
    ks = jax.random.split(key, 3)

    def heads(k):
        bound = 1.0 / math.sqrt(dh)
        kw, kb = jax.random.split(k)
        w = jax.random.uniform(kw, (n_heads, dh, dh), jnp.float32, -bound, bound)
        b = jax.random.uniform(kb, (n_heads, dh), jnp.float32, -bound, bound)
        return w, b

    wq, bq = heads(ks[0])
    wk, bk = heads(ks[1])
    wv, bv = heads(ks[2])
    return dict(wq=wq, bq=bq, wk=wk, bk=bk, wv=wv, bv=bv)


# ----------------------------------------------------------------------------
# Pure-JAX f32 reference mirroring the PyTorch forward
# ----------------------------------------------------------------------------
def reference(x, params, n_heads):
    B, S, D = x.shape
    dh = D // n_heads
    outs = []
    for b in range(B):
        head_outs = []
        for h in range(n_heads):
            seq = x[b, :, h * dh:(h + 1) * dh]
            q = seq @ params["wq"][h].T + params["bq"][h]
            k = seq @ params["wk"][h].T + params["bk"][h]
            v = seq @ params["wv"][h].T + params["bv"][h]
            a = jax.nn.softmax(q @ k.T / math.sqrt(dh), axis=-1)
            head_outs.append(a @ v)
        outs.append(jnp.concatenate(head_outs, axis=-1))
    return jnp.stack(outs)


if __name__ == "__main__":
    B, S, D, n_heads = 2, 8, 32, 2

    key = jax.random.PRNGKey(0)
    kx, kp = jax.random.split(key)
    x = jax.random.normal(kx, (B, S, D), jnp.float32)
    params = init_params(kp, D, n_heads)

    out = my_msa(x, params, n_heads)
    out = jax.block_until_ready(out)

    ref = reference(x, params, n_heads)
    assert out.shape == (B, S, D)
    # bf16 matmul operands (f32 accumulation) -> loosened tolerance vs f32 reference.
    max_err = float(jnp.max(jnp.abs(out - ref)))
    assert jnp.allclose(out, ref, atol=5e-2, rtol=5e-2), max_err

    print("KERNEL_OK")
</pallas_src>

<mosaic_0001>
module attributes {stable_mosaic.version = 11 : i64} {
  func.func @msa_kernel(%arg0: i32, %arg1: memref<1x8x32xbf16, #tpu.memory_space<vmem>>, %arg2: memref<32x32xbf16, #tpu.memory_space<vmem>>, %arg3: memref<1x32xf32, #tpu.memory_space<vmem>>, %arg4: memref<32x32xbf16, #tpu.memory_space<vmem>>, %arg5: memref<1x32xf32, #tpu.memory_space<vmem>>, %arg6: memref<32x32xbf16, #tpu.memory_space<vmem>>, %arg7: memref<1x32xf32, #tpu.memory_space<vmem>>, %arg8: memref<1x8x32xf32, #tpu.memory_space<vmem>>) attributes {dimension_semantics = [#tpu.dimension_semantics<parallel>], iteration_bounds = array<i64: 2>, scalar_prefetch = 0 : i64, scratch_operands = 0 : i64, tpu.core_type = #tpu.core_type<tc>, window_params = [{transform_indices = @transform_0, window_bounds = array<i64: 1, 8, 32>}, {pipeline_mode = #tpu.pipeline_mode<synchronous>, transform_indices = @transform_1, window_bounds = array<i64: 32, 32>}, {pipeline_mode = #tpu.pipeline_mode<synchronous>, transform_indices = @transform_2, window_bounds = array<i64: 1, 32>}, {pipeline_mode = #tpu.pipeline_mode<synchronous>, transform_indices = @transform_3, window_bounds = array<i64: 32, 32>}, {pipeline_mode = #tpu.pipeline_mode<synchronous>, transform_indices = @transform_4, window_bounds = array<i64: 1, 32>}, {pipeline_mode = #tpu.pipeline_mode<synchronous>, transform_indices = @transform_5, window_bounds = array<i64: 32, 32>}, {pipeline_mode = #tpu.pipeline_mode<synchronous>, transform_indices = @transform_6, window_bounds = array<i64: 1, 32>}, {transform_indices = @transform_7, window_bounds = array<i64: 1, 8, 32>}]} {
    %c0 = arith.constant 0 : index
    %c0_0 = arith.constant 0 : index
    %c0_1 = arith.constant 0 : index
    %0 = vector.load %arg1[%c0, %c0_0, %c0_1] : memref<1x8x32xbf16, #tpu.memory_space<vmem>>, vector<1x8x32xbf16>
    %1 = vector.shape_cast %0 : vector<1x8x32xbf16> to vector<8x32xbf16>
    %c0_2 = arith.constant 0 : index
    %c0_3 = arith.constant 0 : index
    %2 = vector.load %arg2[%c0_2, %c0_3] : memref<32x32xbf16, #tpu.memory_space<vmem>>, vector<32x32xbf16>
    %cst = arith.constant dense<0.000000e+00> : vector<8x32xf32>
    %3 = tpu.matmul %1, %2, %cst {dimension_numbers = #tpu.dot_dimension_numbers<[1], [0], [0], [1], [0, 0, 1, 1], [], []>} : vector<8x32xbf16>, vector<32x32xbf16>, vector<8x32xf32> -> vector<8x32xf32>
    %c0_4 = arith.constant 0 : index
    %c0_5 = arith.constant 0 : index
    %4 = vector.load %arg3[%c0_4, %c0_5] : memref<1x32xf32, #tpu.memory_space<vmem>>, vector<1x32xf32>
    %5 = vector.broadcast %4 : vector<1x32xf32> to vector<8x32xf32>
    %6 = arith.addf %3, %5 : vector<8x32xf32>
    %c0_6 = arith.constant 0 : index
    %c0_7 = arith.constant 0 : index
    %7 = vector.load %arg4[%c0_6, %c0_7] : memref<32x32xbf16, #tpu.memory_space<vmem>>, vector<32x32xbf16>
    %cst_8 = arith.constant dense<0.000000e+00> : vector<8x32xf32>
    %8 = tpu.matmul %1, %7, %cst_8 {dimension_numbers = #tpu.dot_dimension_numbers<[1], [0], [0], [1], [0, 0, 1, 1], [], []>} : vector<8x32xbf16>, vector<32x32xbf16>, vector<8x32xf32> -> vector<8x32xf32>
    %c0_9 = arith.constant 0 : index
    %c0_10 = arith.constant 0 : index
    %9 = vector.load %arg5[%c0_9, %c0_10] : memref<1x32xf32, #tpu.memory_space<vmem>>, vector<1x32xf32>
    %10 = vector.broadcast %9 : vector<1x32xf32> to vector<8x32xf32>
    %11 = arith.addf %8, %10 : vector<8x32xf32>
    %c0_11 = arith.constant 0 : index
    %c0_12 = arith.constant 0 : index
    %12 = vector.load %arg6[%c0_11, %c0_12] : memref<32x32xbf16, #tpu.memory_space<vmem>>, vector<32x32xbf16>
    %cst_13 = arith.constant dense<0.000000e+00> : vector<8x32xf32>
    %13 = tpu.matmul %1, %12, %cst_13 {dimension_numbers = #tpu.dot_dimension_numbers<[1], [0], [0], [1], [0, 0, 1, 1], [], []>} : vector<8x32xbf16>, vector<32x32xbf16>, vector<8x32xf32> -> vector<8x32xf32>
    %c0_14 = arith.constant 0 : index
    %c0_15 = arith.constant 0 : index
    %14 = vector.load %arg7[%c0_14, %c0_15] : memref<1x32xf32, #tpu.memory_space<vmem>>, vector<1x32xf32>
    %15 = vector.broadcast %14 : vector<1x32xf32> to vector<8x32xf32>
    %16 = arith.addf %13, %15 : vector<8x32xf32>
    %17 = vector.extract_strided_slice %6 {offsets = [0, 0], sizes = [8, 16], strides = [1, 1]} : vector<8x32xf32> to vector<8x16xf32>
    %18 = arith.truncf %17 : vector<8x16xf32> to vector<8x16xbf16>
    %19 = vector.shape_cast %18 : vector<8x16xbf16> to vector<1x8x16xbf16>
    %20 = vector.extract_strided_slice %6 {offsets = [0, 16], sizes = [8, 16], strides = [1, 1]} : vector<8x32xf32> to vector<8x16xf32>
    %21 = arith.truncf %20 : vector<8x16xf32> to vector<8x16xbf16>
    %22 = vector.shape_cast %21 : vector<8x16xbf16> to vector<1x8x16xbf16>
    %23 = vector.shape_cast %19 : vector<1x8x16xbf16> to vector<1x1x8x16xbf16>
    %24 = vector.shape_cast %22 : vector<1x8x16xbf16> to vector<1x1x8x16xbf16>
    %25 = tpu.concatenate %23, %24 in 0 : vector<1x1x8x16xbf16>, vector<1x1x8x16xbf16> -> vector<2x1x8x16xbf16>
    %26 = vector.shape_cast %25 : vector<2x1x8x16xbf16> to vector<2x8x16xbf16>
    %27 = vector.extract_strided_slice %11 {offsets = [0, 0], sizes = [8, 16], strides = [1, 1]} : vector<8x32xf32> to vector<8x16xf32>
    %28 = arith.truncf %27 : vector<8x16xf32> to vector<8x16xbf16>
    %29 = vector.shape_cast %28 : vector<8x16xbf16> to vector<1x8x16xbf16>
    %30 = vector.extract_strided_slice %11 {offsets = [0, 16], sizes = [8, 16], strides = [1, 1]} : vector<8x32xf32> to vector<8x16xf32>
    %31 = arith.truncf %30 : vector<8x16xf32> to vector<8x16xbf16>
    %32 = vector.shape_cast %31 : vector<8x16xbf16> to vector<1x8x16xbf16>
    %33 = vector.shape_cast %29 : vector<1x8x16xbf16> to vector<1x1x8x16xbf16>
    %34 = vector.shape_cast %32 : vector<1x8x16xbf16> to vector<1x1x8x16xbf16>
    %35 = tpu.concatenate %33, %34 in 0 : vector<1x1x8x16xbf16>, vector<1x1x8x16xbf16> -> vector<2x1x8x16xbf16>
    %36 = vector.shape_cast %35 : vector<2x1x8x16xbf16> to vector<2x8x16xbf16>
    %37 = vector.extract_strided_slice %16 {offsets = [0, 0], sizes = [8, 16], strides = [1, 1]} : vector<8x32xf32> to vector<8x16xf32>
    %38 = arith.truncf %37 : vector<8x16xf32> to vector<8x16xbf16>
    %39 = vector.shape_cast %38 : vector<8x16xbf16> to vector<1x8x16xbf16>
    %40 = vector.extract_strided_slice %16 {offsets = [0, 16], sizes = [8, 16], strides = [1, 1]} : vector<8x32xf32> to vector<8x16xf32>
    %41 = arith.truncf %40 : vector<8x16xf32> to vector<8x16xbf16>
    %42 = vector.shape_cast %41 : vector<8x16xbf16> to vector<1x8x16xbf16>
    %43 = vector.shape_cast %39 : vector<1x8x16xbf16> to vector<1x1x8x16xbf16>
    %44 = vector.shape_cast %42 : vector<1x8x16xbf16> to vector<1x1x8x16xbf16>
    %45 = tpu.concatenate %43, %44 in 0 : vector<1x1x8x16xbf16>, vector<1x1x8x16xbf16> -> vector<2x1x8x16xbf16>
    %46 = vector.shape_cast %45 : vector<2x1x8x16xbf16> to vector<2x8x16xbf16>
    "tpu.trace_start"() <{level = 10 : i32, message = "nqd,nkd->nqk"}> : () -> ()
    %cst_16 = arith.constant dense<0.000000e+00> : vector<2x8x8xf32>
    %47 = tpu.matmul %26, %36, %cst_16 {dimension_numbers = #tpu.dot_dimension_numbers<[2], [2], [1], [1], [0, 0, 0, 1, 1, 1], [0], [0]>} : vector<2x8x16xbf16>, vector<2x8x16xbf16>, vector<2x8x8xf32> -> vector<2x8x8xf32>
    "tpu.trace_stop"() : () -> ()
    %cst_17 = arith.constant dense<0xFF800000> : vector<2x8xf32>
    %48 = vector.multi_reduction <maximumf>, %47, %cst_17 [2] : vector<2x8x8xf32> to vector<2x8xf32>
    %49 = vector.shape_cast %48 : vector<2x8xf32> to vector<2x8x1xf32>
    %50 = vector.broadcast %49 : vector<2x8x1xf32> to vector<2x8x8xf32>
    %51 = arith.subf %47, %50 : vector<2x8x8xf32>
    %52 = math.exp %51 : vector<2x8x8xf32>
    %cst_18 = arith.constant dense<0.000000e+00> : vector<2x8xf32>
    %53 = vector.multi_reduction <add>, %52, %cst_18 [2] : vector<2x8x8xf32> to vector<2x8xf32>
    %54 = vector.shape_cast %53 : vector<2x8xf32> to vector<2x8x1xf32>
    %55 = arith.truncf %52 : vector<2x8x8xf32> to vector<2x8x8xbf16>
    "tpu.trace_start"() <{level = 10 : i32, message = "nqk,nkd->nqd"}> : () -> ()
    %cst_19 = arith.constant dense<0.000000e+00> : vector<2x8x16xf32>
    %56 = tpu.matmul %55, %46, %cst_19 {dimension_numbers = #tpu.dot_dimension_numbers<[2], [1], [1], [2], [0, 0, 0, 1, 1, 2], [0], [0]>} : vector<2x8x8xbf16>, vector<2x8x16xbf16>, vector<2x8x16xf32> -> vector<2x8x16xf32>
    "tpu.trace_stop"() : () -> ()
    %57 = tpu.reciprocal %54 : vector<2x8x1xf32> -> vector<2x8x1xf32>
    %58 = vector.broadcast %57 : vector<2x8x1xf32> to vector<2x8x16xf32>
    %59 = arith.mulf %56, %58 : vector<2x8x16xf32>
    %60 = vector.shape_cast %59 : vector<2x8x16xf32> to vector<2x1x8x16xf32>
    %61 = vector.extract_strided_slice %60 {offsets = [0, 0, 0, 0], sizes = [1, 1, 8, 16], strides = [1, 1, 1, 1]} : vector<2x1x8x16xf32> to vector<1x1x8x16xf32>
    %62 = vector.shape_cast %61 : vector<1x1x8x16xf32> to vector<1x8x16xf32>
    %c0_20 = arith.constant 0 : index
    %c0_21 = arith.constant 0 : index
    %c0_22 = arith.constant 0 : index
    %63 = vector.load %arg8[%c0_20, %c0_21, %c0_22] : memref<1x8x32xf32, #tpu.memory_space<vmem>>, vector<1x8x16xf32>
    tpu.vector_store %arg8[%c0_20, %c0_21, %c0_22], %62 {strides = array<i32>} : memref<1x8x32xf32, #tpu.memory_space<vmem>>, vector<1x8x16xf32>,
    %64 = vector.extract_strided_slice %60 {offsets = [1, 0, 0, 0], sizes = [1, 1, 8, 16], strides = [1, 1, 1, 1]} : vector<2x1x8x16xf32> to vector<1x1x8x16xf32>
    %65 = vector.shape_cast %64 : vector<1x1x8x16xf32> to vector<1x8x16xf32>
    %c0_23 = arith.constant 0 : index
    %c0_24 = arith.constant 0 : index
    %c16 = arith.constant 16 : index
    %66 = vector.load %arg8[%c0_23, %c0_24, %c16] : memref<1x8x32xf32, #tpu.memory_space<vmem>>, vector<1x8x16xf32>
    tpu.vector_store %arg8[%c0_23, %c0_24, %c16], %65 {strides = array<i32>} : memref<1x8x32xf32, #tpu.memory_space<vmem>>, vector<1x8x16xf32>,
    return
  }
  func.func @transform_0(%arg0: i32) -> (i32, i32, i32) {
    %c0_i32 = arith.constant 0 : i32
    %c0_i32_0 = arith.constant 0 : i32
    %c0_i32_1 = arith.constant 0 : i32
    return %arg0, %c0_i32, %c0_i32_0 : i32, i32, i32
  }
  func.func @transform_1(%arg0: i32) -> (i32, i32) {
    %c0_i32 = arith.constant 0 : i32
    %c0_i32_0 = arith.constant 0 : i32
    %c0_i32_1 = arith.constant 0 : i32
    return %c0_i32, %c0_i32_0 : i32, i32
  }
  func.func @transform_2(%arg0: i32) -> (i32, i32) {
    %c0_i32 = arith.constant 0 : i32
    %c0_i32_0 = arith.constant 0 : i32
    %c0_i32_1 = arith.constant 0 : i32
    return %c0_i32, %c0_i32_0 : i32, i32
  }
  func.func @transform_3(%arg0: i32) -> (i32, i32) {
    %c0_i32 = arith.constant 0 : i32
    %c0_i32_0 = arith.constant 0 : i32
    %c0_i32_1 = arith.constant 0 : i32
    return %c0_i32, %c0_i32_0 : i32, i32
  }
  func.func @transform_4(%arg0: i32) -> (i32, i32) {
    %c0_i32 = arith.constant 0 : i32
    %c0_i32_0 = arith.constant 0 : i32
    %c0_i32_1 = arith.constant 0 : i32
    return %c0_i32, %c0_i32_0 : i32, i32
  }
  func.func @transform_5(%arg0: i32) -> (i32, i32) {
    %c0_i32 = arith.constant 0 : i32
    %c0_i32_0 = arith.constant 0 : i32
    %c0_i32_1 = arith.constant 0 : i32
    return %c0_i32, %c0_i32_0 : i32, i32
  }
  func.func @transform_6(%arg0: i32) -> (i32, i32) {
    %c0_i32 = arith.constant 0 : i32
    %c0_i32_0 = arith.constant 0 : i32
    %c0_i32_1 = arith.constant 0 : i32
    return %c0_i32, %c0_i32_0 : i32, i32
  }
  func.func @transform_7(%arg0: i32) -> (i32, i32, i32) {
    %c0_i32 = arith.constant 0 : i32
    %c0_i32_0 = arith.constant 0 : i32
    %c0_i32_1 = arith.constant 0 : i32
    return %arg0, %c0_i32, %c0_i32_0 : i32, i32, i32
  }
}

</mosaic_0001>

<llo_original>
// kernel: tpu_custom_call.1
$region0: #{tpu_custom_call.1}
  #allocation0 [shape = 'u32[]', space=smem, size = 0x4, offset = 0x4, fixed_abs, tag = 'smem constant byte address 0x4 - core index']
  #allocation1 [shape = 'u32[144,128]{1,0:T(1,128)}', space=vmem, size = 0x12000, scoped, tag = 'internal scratch']
  %s0 = inlined_call_operand.hbm [shape: bf16[2,8,32], index: 0, kind: input, shape index: {}]
  %s1 = inlined_call_operand.hbm [shape: bf16[32,32], index: 1, kind: input, shape index: {}]
  %s2 = inlined_call_operand.vmem [shape: f32[1,32], index: 2, kind: input, shape index: {}]
  %s3 = inlined_call_operand.hbm [shape: bf16[32,32], index: 3, kind: input, shape index: {}]
  %s4 = inlined_call_operand.vmem [shape: f32[1,32], index: 4, kind: input, shape index: {}]
  %s5 = inlined_call_operand.vmem [shape: bf16[32,32], index: 5, kind: input, shape index: {}]
  %s6 = inlined_call_operand.vmem [shape: f32[1,32], index: 6, kind: input, shape index: {}]
  %s7 = inlined_call_operand.hbm [shape: f32[2,8,32], index: 7, kind: output, shape index: {}]
  %s8 = sld [smem:[#allocation0]]
  $region73: #{tpu_custom_call.1} parent=0
    _
  %s10 = ssub.s32 1, %s8
  %s11 = scalar_select 0, %s10, %s8
  $region1: #{tpu_custom_call.1} parent=0
    #allocation2 [shape = 'u8[4096]{0}', space=vmem, size = 0x1000, scoped, tag = 'input window, operand 0']
    #allocation3 [shape = 's32[2]{0}', space=sflag, size = 0x8, scoped, tag = 'scoped memory for tpu_custom_call.1']
    #allocation4 [shape = 's32[2]{0}', space=sflag, size = 0x8, scoped, tag = 'scoped memory for tpu_custom_call.1']
    #allocation5 [shape = 'u8[8192]{0}', space=vmem, size = 0x2000, scoped, tag = 'input window, operand 1, single buffered']
    #allocation6 [shape = 's32[1]{0}', space=sflag, size = 0x4, scoped, tag = 'scoped memory for tpu_custom_call.1']
    #allocation7 [shape = 'u8[8192]{0}', space=vmem, size = 0x2000, scoped, tag = 'input window, operand 3, single buffered']
    #allocation8 [shape = 'u8[8192]{0}', space=vmem, size = 0x2000, scoped, tag = 'output window, operand 0']
    %12 = vsyncpa [#allocation3], 0
    %s13 = scalar_lea.sflag [#allocation3], 1
    %14 = vsyncpa %s13, 0
    %15 = vsyncpa [#allocation6], 0
    %16 = vsyncpa [#allocation4], 0
    %s17 = scalar_lea.sflag [#allocation4], 1
    %18 = vsyncpa %s17, 0
    loop: start=0, step=1, limit=4
    $region2: #{tpu_custom_call.1} parent=1 // loop_pre_header
      _
    $region3: #{tpu_custom_call.1} parent=1 // loop_header
      %s20 = sphi 0, %s24
      %p21 = scmp.ge.s32.totalorder %s20, 4
      %s30 = sphi 0, %s32
      %s33 = sphi 0, %s30
      %s34 = sphi 0, %s33
      %s50 = sphi 0, %s34
      %s54 = sphi 0, %s54
      %s56 = sphi 0, %s54
      %s57 = sphi 0, %s56
      %s71 = sphi 0, %s57
      %s75 = sphi 0, %s75
      %s77 = sphi 0, %s75
      %s78 = sphi 0, %s77
      %s92 = sphi 0, %s78
      %s96 = sphi 0, %s96
      %s98 = sphi 0, %s96
      %s99 = sphi 0, %s98
      %s113 = sphi 0, %s99
      %s117 = sphi 0, %s117
      %s119 = sphi 0, %s117
      %s120 = sphi 0, %s119
      %s134 = sphi 0, %s120
      %s138 = sphi 0, %s138
      %s140 = sphi 0, %s138
      %s141 = sphi 0, %s140
      %s155 = sphi 0, %s141
      %s159 = sphi 0, %s159
      %s161 = sphi 0, %s159
      %s162 = sphi 0, %s161
      %s176 = sphi 0, %s162
      %s182 = sphi 0, %s184
      %s185 = sphi 0, %s182
      %s186 = sphi 0, %s185
      %s202 = sphi 0, %s186
    $region4: #{tpu_custom_call.1} parent=1 // loop_header_branch
      %23 = sbr.rel (%p21) target = $region8
    $region5: #{tpu_custom_call.1} parent=1 // loop_body
      %s25 = ssub.s32 %s20, 1
      %s26 = ssub.s32 %s20, 2
      %s27 = sadd.s32 %s20, 1
      %s28 = ssub.s32 %s20, %s27
      %p29 = scmp.eq.s32.totalorder %s28, 0
      %s31 = sadd.s32 %s30, 1
      %s32 = scalar_select %p29, %s30, %s31
      %p35 = pneg %p29
      %p36 = scmp.eq.s32.totalorder %s20, 1
      %p37 = por %p35, %p36
      %p38 = scmp.ne.s32.totalorder %s30, %s33
      %p39 = scmp.eq.s32.totalorder %s20, 0
      %p40 = por %p38, %p39
      %p41 = scmp.ne.s32.totalorder %s30, %s33
      %p42 = scmp.eq.s32.totalorder %s25, 1
      %p43 = por %p41, %p42
      %p44 = scmp.ne.s32.totalorder %s33, %s34
      %p45 = scmp.eq.s32.totalorder %s25, 0
      %p46 = por %p44, %p45
      %p47 = scmp.ne.s32.totalorder %s33, %s34
      %p48 = scmp.eq.s32.totalorder %s26, 1
      %p49 = por %p47, %p48
      %p51 = scmp.ne.s32.totalorder %s34, %s50
      %p52 = scmp.eq.s32.totalorder %s26, 0
      %p53 = por %p51, %p52
      %s55 = sadd.s32 %s54, 1
      %p58 = scmp.eq.s32.totalorder %s20, 1
      %p59 = scmp.ne.s32.totalorder %s54, %s56
      %p60 = scmp.eq.s32.totalorder %s20, 0
      %p61 = por %p59, %p60
      %p62 = scmp.ne.s32.totalorder %s54, %s56
      %p63 = scmp.eq.s32.totalorder %s25, 1
      %p64 = por %p62, %p63
      %p65 = scmp.ne.s32.totalorder %s56, %s57
      %p66 = scmp.eq.s32.totalorder %s25, 0
      %p67 = por %p65, %p66
      %p68 = scmp.ne.s32.totalorder %s56, %s57
      %p69 = scmp.eq.s32.totalorder %s26, 1
      %p70 = por %p68, %p69
      %p72 = scmp.ne.s32.totalorder %s57, %s71
      %p73 = scmp.eq.s32.totalorder %s26, 0
      %p74 = por %p72, %p73
      %s76 = sadd.s32 %s75, 1
      %p79 = scmp.eq.s32.totalorder %s20, 1
      %p80 = scmp.ne.s32.totalorder %s75, %s77
      %p81 = scmp.eq.s32.totalorder %s20, 0
      %p82 = por %p80, %p81
      %p83 = scmp.ne.s32.totalorder %s75, %s77
      %p84 = scmp.eq.s32.totalorder %s25, 1
      %p85 = por %p83, %p84
      %p86 = scmp.ne.s32.totalorder %s77, %s78
      %p87 = scmp.eq.s32.totalorder %s25, 0
      %p88 = por %p86, %p87
      %p89 = scmp.ne.s32.totalorder %s77, %s78
      %p90 = scmp.eq.s32.totalorder %s26, 1
      %p91 = por %p89, %p90
      %p93 = scmp.ne.s32.totalorder %s78, %s92
      %p94 = scmp.eq.s32.totalorder %s26, 0
      %p95 = por %p93, %p94
      %s97 = sadd.s32 %s96, 1
      %p100 = scmp.eq.s32.totalorder %s20, 1
      %p101 = scmp.ne.s32.totalorder %s96, %s98
      %p102 = scmp.eq.s32.totalorder %s20, 0
      %p103 = por %p101, %p102
      %p104 = scmp.ne.s32.totalorder %s96, %s98
      %p105 = scmp.eq.s32.totalorder %s25, 1
      %p106 = por %p104, %p105
      %p107 = scmp.ne.s32.totalorder %s98, %s99
      %p108 = scmp.eq.s32.totalorder %s25, 0
      %p109 = por %p107, %p108
      %p110 = scmp.ne.s32.totalorder %s98, %s99
      %p111 = scmp.eq.s32.totalorder %s26, 1
      %p112 = por %p110, %p111
      %p114 = scmp.ne.s32.totalorder %s99, %s113
      %p115 = scmp.eq.s32.totalorder %s26, 0
      %p116 = por %p114, %p115
      %s118 = sadd.s32 %s117, 1
      %p121 = scmp.eq.s32.totalorder %s20, 1
      %p122 = scmp.ne.s32.totalorder %s117, %s119
      %p123 = scmp.eq.s32.totalorder %s20, 0
      %p124 = por %p122, %p123
      %p125 = scmp.ne.s32.totalorder %s117, %s119
      %p126 = scmp.eq.s32.totalorder %s25, 1
      %p127 = por %p125, %p126
      %p128 = scmp.ne.s32.totalorder %s119, %s120
      %p129 = scmp.eq.s32.totalorder %s25, 0
      %p130 = por %p128, %p129
      %p131 = scmp.ne.s32.totalorder %s119, %s120
      %p132 = scmp.eq.s32.totalorder %s26, 1
      %p133 = por %p131, %p132
      %p135 = scmp.ne.s32.totalorder %s120, %s134
      %p136 = scmp.eq.s32.totalorder %s26, 0
      %p137 = por %p135, %p136
      %s139 = sadd.s32 %s138, 1
      %p142 = scmp.eq.s32.totalorder %s20, 1
      %p143 = scmp.ne.s32.totalorder %s138, %s140
      %p144 = scmp.eq.s32.totalorder %s20, 0
      %p145 = por %p143, %p144
      %p146 = scmp.ne.s32.totalorder %s138, %s140
      %p147 = scmp.eq.s32.totalorder %s25, 1
      %p148 = por %p146, %p147
      %p149 = scmp.ne.s32.totalorder %s140, %s141
      %p150 = scmp.eq.s32.totalorder %s25, 0
      %p151 = por %p149, %p150
      %p152 = scmp.ne.s32.totalorder %s140, %s141
      %p153 = scmp.eq.s32.totalorder %s26, 1
      %p154 = por %p152, %p153
      %p156 = scmp.ne.s32.totalorder %s141, %s155
      %p157 = scmp.eq.s32.totalorder %s26, 0
      %p158 = por %p156, %p157
      %s160 = sadd.s32 %s159, 1
      %p163 = scmp.eq.s32.totalorder %s20, 1
      %p164 = scmp.ne.s32.totalorder %s159, %s161
      %p165 = scmp.eq.s32.totalorder %s20, 0
      %p166 = por %p164, %p165
      %p167 = scmp.ne.s32.totalorder %s159, %s161
      %p168 = scmp.eq.s32.totalorder %s25, 1
      %p169 = por %p167, %p168
      %p170 = scmp.ne.s32.totalorder %s161, %s162
      %p171 = scmp.eq.s32.totalorder %s25, 0
      %p172 = por %p170, %p171
      %p173 = scmp.ne.s32.totalorder %s161, %s162
      %p174 = scmp.eq.s32.totalorder %s26, 1
      %p175 = por %p173, %p174
      %p177 = scmp.ne.s32.totalorder %s162, %s176
      %p178 = scmp.eq.s32.totalorder %s26, 0
      %p179 = por %p177, %p178
      %s180 = ssub.s32 %s20, %s27
      %p181 = scmp.eq.s32.totalorder %s180, 0
      %s183 = sadd.s32 %s182, 1
      %s184 = scalar_select %p181, %s182, %s183
      %p187 = pneg %p181
      %p188 = scmp.eq.s32.totalorder %s20, 1
      %p189 = por %p187, %p188
      %p190 = scmp.ne.s32.totalorder %s182, %s185
      %p191 = scmp.eq.s32.totalorder %s20, 0
      %p192 = por %p190, %p191
      %p193 = scmp.ne.s32.totalorder %s182, %s185
      %p194 = scmp.eq.s32.totalorder %s25, 1
      %p195 = por %p193, %p194
      %p196 = scmp.ne.s32.totalorder %s185, %s186
      %p197 = scmp.eq.s32.totalorder %s25, 0
      %p198 = por %p196, %p197
      %p199 = scmp.ne.s32.totalorder %s185, %s186
      %p200 = scmp.eq.s32.totalorder %s26, 1
      %p201 = por %p199, %p200
      %p203 = scmp.ne.s32.totalorder %s186, %s202
      %p204 = scmp.eq.s32.totalorder %s26, 0
      %p205 = por %p203, %p204
      %p206 = scmp.le.s32.totalorder 1, %s20
      %p207 = scmp.lt.s32.totalorder %s20, 3
      %p208 = pnand %p206, %p207
      %p209 = pneg %p208
      // Predicated region
      $region9: #{tpu_custom_call.1} parent=5 // pred_check
        _
      $region10: #{tpu_custom_call.1} parent=5 // pred_check_branch
        %211 = sbr.rel (%p208) target = $region12
      $region11: #{tpu_custom_call.1} parent=5 // pred_region
        %s212 = ssub.s32 %s20, 1
        // Predicated region
        $region13: #{tpu_custom_call.1} parent=11 // pred_check
          %p213 = pneg %p67
        $region14: #{tpu_custom_call.1} parent=11 // pred_check_branch
          %215 = sbr.rel (%p213) target = $region16
        $region15: #{tpu_custom_call.1} parent=11 // pred_region
          %s217 = ssub.s32 256, 256
          %218 = vsyncadd [#allocation6], %s217
          %s219 = sshll.u32 [#allocation5], 4
          %s220 = int_to_ptr.vmem [resolvable:$true] %s219
          %225 = dma.hbm_to_vmem [thread:$0]  %s1, 256, %s220, [#allocation6], 64, 64, 4
        $region16: #{tpu_custom_call.1} parent=11 // pred_fallthru
          _
        // Predicated region
        $region17: #{tpu_custom_call.1} parent=11 // pred_check
          %p226 = pneg %p88
        $region18: #{tpu_custom_call.1} parent=11 // pred_check_branch
          %228 = sbr.rel (%p226) target = $region20
        $region19: #{tpu_custom_call.1} parent=11 // pred_region
          _
        $region20: #{tpu_custom_call.1} parent=11 // pred_fallthru
          _
        // Predicated region
        $region21: #{tpu_custom_call.1} parent=11 // pred_check
          %p229 = pneg %p109
        $region22: #{tpu_custom_call.1} parent=11 // pred_check_branch
          %231 = sbr.rel (%p229) target = $region24
        $region23: #{tpu_custom_call.1} parent=11 // pred_region
          %s233 = ssub.s32 256, 256
          %234 = vsyncadd [#allocation6], %s233
          %s235 = sshll.u32 [#allocation7], 4
          %s236 = int_to_ptr.vmem [resolvable:$true] %s235
          %241 = dma.hbm_to_vmem [thread:$0]  %s3, 256, %s236, [#allocation6], 64, 64, 4
        $region24: #{tpu_custom_call.1} parent=11 // pred_fallthru
          _
        // Predicated region
        $region25: #{tpu_custom_call.1} parent=11 // pred_check
          %p242 = pneg %p130
        $region26: #{tpu_custom_call.1} parent=11 // pred_check_branch
          %244 = sbr.rel (%p242) target = $region28
        $region27: #{tpu_custom_call.1} parent=11 // pred_region
          _
        $region28: #{tpu_custom_call.1} parent=11 // pred_fallthru
          _
        // Predicated region
        $region29: #{tpu_custom_call.1} parent=11 // pred_check
          %p245 = pneg %p151
        $region30: #{tpu_custom_call.1} parent=11 // pred_check_branch
          %247 = sbr.rel (%p245) target = $region32
        $region31: #{tpu_custom_call.1} parent=11 // pred_region
          _
        $region32: #{tpu_custom_call.1} parent=11 // pred_fallthru
          _
        // Predicated region
        $region33: #{tpu_custom_call.1} parent=11 // pred_check
          %p248 = pneg %p172
        $region34: #{tpu_custom_call.1} parent=11 // pred_check_branch
          %250 = sbr.rel (%p248) target = $region36
        $region35: #{tpu_custom_call.1} parent=11 // pred_region
          _
        $region36: #{tpu_custom_call.1} parent=11 // pred_fallthru
          _
      $region12: #{tpu_custom_call.1} parent=5 // pred_fallthru
        _
      %p251 = scmp.lt.s32.totalorder %s20, 2
      // Predicated region
      $region37: #{tpu_custom_call.1} parent=5 // pred_check
        %p252 = pneg %p251
      $region38: #{tpu_custom_call.1} parent=5 // pred_check_branch
        %254 = sbr.rel (%p252) target = $region40
      $region39: #{tpu_custom_call.1} parent=5 // pred_region
        // Predicated region
        $region41: #{tpu_custom_call.1} parent=39 // pred_check
          %p255 = pneg %p40
        $region42: #{tpu_custom_call.1} parent=39 // pred_check_branch
          %257 = sbr.rel (%p255) target = $region44
        $region43: #{tpu_custom_call.1} parent=39 // pred_region
          %s258 = sand.u32 %s30, 1
          %s259 = scalar_lea.sflag [#allocation3], %s258
          %s260 = sand.u32 %s30, 1
          %s261 = smul.addr %s260, 4
          %s262 = scalar_lea.vmem [#allocation2], %s261
          %s264 = ssub.s32 64, 64
          %265 = vsyncadd %s259, %s264
          %s266 = smul.addr %s20, 64
          %s267 = scalar_lea.hbm %s0, %s266
          %s269 = sshll.u32 %s262, 4
          %s270 = int_to_ptr.vmem [resolvable:$true] %s269
          %272 = dma.hbm_to_vmem [thread:$0]  %s267, 64, %s270, %s259
        $region44: #{tpu_custom_call.1} parent=39 // pred_fallthru
          _
      $region40: #{tpu_custom_call.1} parent=5 // pred_fallthru
        _
      %p273 = scmp.le.s32.totalorder 1, %s20
      %p274 = scmp.lt.s32.totalorder %s20, 3
      %p275 = pnand %p273, %p274
      %p276 = pneg %p275
      // Predicated region
      $region45: #{tpu_custom_call.1} parent=5 // pred_check
        _
      $region46: #{tpu_custom_call.1} parent=5 // pred_check_branch
        %278 = sbr.rel (%p275) target = $region48
      $region47: #{tpu_custom_call.1} parent=5 // pred_region
        %s279 = ssub.s32 %s20, 1
        %s280 = sand.u32 %s33, 1
        %s281 = scalar_lea.sflag [#allocation3], %s280
        %s282 = sand.u32 %s33, 1
        %s283 = smul.addr %s282, 4
        %s284 = scalar_lea.vmem [#allocation2], %s283
        // Predicated region
        $region49: #{tpu_custom_call.1} parent=47 // pred_check
          %p285 = pneg %p46
        $region50: #{tpu_custom_call.1} parent=47 // pred_check_branch
          %287 = sbr.rel (%p285) target = $region52
        $region51: #{tpu_custom_call.1} parent=47 // pred_region
          %288 = dma.done %s281, 64
        $region52: #{tpu_custom_call.1} parent=47 // pred_fallthru
          _
        // Predicated region
        $region53: #{tpu_custom_call.1} parent=47 // pred_check
          %p289 = pneg %p67
        $region54: #{tpu_custom_call.1} parent=47 // pred_check_branch
          %291 = sbr.rel (%p289) target = $region56
        $region55: #{tpu_custom_call.1} parent=47 // pred_region
          %292 = dma.done [#allocation6], 256
        $region56: #{tpu_custom_call.1} parent=47 // pred_fallthru
          _
        // Predicated region
        $region57: #{tpu_custom_call.1} parent=47 // pred_check
          %p293 = pneg %p109
        $region58: #{tpu_custom_call.1} parent=47 // pred_check_branch
          %295 = sbr.rel (%p293) target = $region60
        $region59: #{tpu_custom_call.1} parent=47 // pred_region
          %296 = dma.done [#allocation6], 256
        $region60: #{tpu_custom_call.1} parent=47 // pred_fallthru
          _
        %s297 = sand.u32 %s33, 1
        %s298 = scalar_lea.sflag [#allocation3], %s297
        %s299 = sand.u32 %s33, 1
        %s300 = smul.addr %s299, 4
        %s301 = scalar_lea.vmem [#allocation2], %s300
        %p302 = pneg %p46
        %p303 = pneg %p43
        %p304 = pneg %p67
        %p305 = pneg %p64
        %p306 = pneg %p88
        %p307 = pneg %p85
        %p308 = pneg %p109
        %p309 = pneg %p106
        %p310 = pneg %p130
        %p311 = pneg %p127
        %p312 = pneg %p151
        %p313 = pneg %p148
        %p314 = pneg %p172
        %p315 = pneg %p169
        %p316 = pneg %p198
        %p317 = pneg %p195
        %s318 = sand.u32 %s185, 1
        %s319 = scalar_lea.sflag [#allocation4], %s318
        %s320 = sand.u32 %s185, 1
        %s321 = smul.addr %s320, 8
        %s322 = scalar_lea.vmem [#allocation8], %s321
        %v324 = vld [vmem:[%s284] sm:$0xf]
        %v325 = vld [vmem:[#allocation5] sm:$0xf]
        %v326 = vld [vmem:[#allocation5 + $0x4] sm:$0xf]
        %v327 = vld [vmem:[#allocation5 + $0x8] sm:$0xf]
        %v328 = vld [vmem:[#allocation5 + $0xc] sm:$0xf]
        %v329 = vld [vmem:[%s2] sm:$0x1]
        %v331 = vlaneseq
        %v332 = vshrl.u32 %v331, 7
        %v333 = vsub.s32 0, %v332
        %v334 = vrot.slane %v329, %v333
        %v340 = vunpack.c.l.b16 %v325
        %v341 = vunpack.c.l.b16 %v326
        %v342 = vunpack.c.l.b16 %v327
        %v343 = vunpack.c.l.b16 %v328
        %v344 = vpack.c.b16 %v341, %v340
        %v345 = vpack.c.b16 %v343, %v342
        %vm348 = vcmask 261120
        %v350 = vsel %vm348, %v324, 0
        %352 = vmatprep.subr.bf16.mxu0 0
        %353 = vmatpush1.bf16.msra.mxu0 %v344
        %354 = vmatprep.subr.bf16.mxu0 0
        %355 = vmatpush1.bf16.msra.mxu0 %v345
        %356 = vmatprep.subr.bf16.mxu0 0
        %357 = vmatpush1.bf16.msra.mxu0 0
        %358 = vmatprep.subr.bf16.mxu0 0
        %359 = vmatpush1.bf16.msra.mxu0 0
        %360 = vmatprep.subr.bf16.mxu0 0
        %361 = vmatpush1.bf16.msra.mxu0 0
        %362 = vmatprep.subr.bf16.mxu0 0
        %363 = vmatpush1.bf16.msra.mxu0 0
        %364 = vmatprep.subr.bf16.mxu0 0
        %365 = vmatpush1.bf16.msra.mxu0 0
        %366 = vmatprep.subr.bf16.mxu0 0
        %367 = vmatpush1.bf16.msra.mxu0 0
        %368 = vmatprep.subr.bf16.mxu0 0
        %369 = vmatpush1.bf16.msra.mxu0 0
        %370 = vmatprep.subr.bf16.mxu0 0
        %371 = vmatpush1.bf16.msra.mxu0 0
        %372 = vmatprep.subr.bf16.mxu0 0
        %373 = vmatpush1.bf16.msra.mxu0 0
        %374 = vmatprep.subr.bf16.mxu0 0
        %375 = vmatpush1.bf16.msra.mxu0 0
        %376 = vmatprep.subr.bf16.mxu0 0
        %377 = vmatpush1.bf16.msra.mxu0 0
        %378 = vmatprep.subr.bf16.mxu0 0
        %379 = vmatpush1.bf16.msra.mxu0 0
        %380 = vmatprep.subr.bf16.mxu0 0
        %381 = vmatpush1.bf16.msra.mxu0 0
        %382 = vmatprep.subr.bf16.mxu0 0
        %383 = vmatpush1.bf16.msra.mxu0 0
        %384 = vmatprep.mubr.bf16.mxu0 0
        %385 = vmatmul.mubr.bf16.gmra.mrb[0].mxu0 %v350
        %v386 = vpop.f32.mrb[0].mxu0
        %v387 = vadd.f32 %v334, %v386
        %v388 = vpop.f32.mrb[0].mxu0
        %v389 = vpop.f32.mrb[0].mxu0
        %v390 = vpop.f32.mrb[0].mxu0
        %391 = vdwg.mxu0
        %v392 = vld [vmem:[#allocation7] sm:$0xf]
        %v393 = vld [vmem:[#allocation7 + $0x4] sm:$0xf]
        %v394 = vld [vmem:[#allocation7 + $0x8] sm:$0xf]
        %v395 = vld [vmem:[#allocation7 + $0xc] sm:$0xf]
        %v396 = vld [vmem:[%s4] sm:$0x1]
        %v398 = vlaneseq
        %v399 = vshrl.u32 %v398, 7
        %v400 = vsub.s32 0, %v399
        %v401 = vrot.slane %v396, %v400
        %v407 = vunpack.c.l.b16 %v392
        %v408 = vunpack.c.l.b16 %v393
        %v409 = vunpack.c.l.b16 %v394
        %v410 = vunpack.c.l.b16 %v395
        %v411 = vpack.c.b16 %v408, %v407
        %v412 = vpack.c.b16 %v410, %v409
        %415 = vmatprep.subr.bf16.mxu0 0
        %416 = vmatpush1.bf16.msra.mxu0 %v411
        %417 = vmatprep.subr.bf16.mxu0 0
        %418 = vmatpush1.bf16.msra.mxu0 %v412
        %419 = vmatprep.subr.bf16.mxu0 0
        %420 = vmatpush1.bf16.msra.mxu0 0
        %421 = vmatprep.subr.bf16.mxu0 0
        %422 = vmatpush1.bf16.msra.mxu0 0
        %423 = vmatprep.subr.bf16.mxu0 0
        %424 = vmatpush1.bf16.msra.mxu0 0
        %425 = vmatprep.subr.bf16.mxu0 0
        %426 = vmatpush1.bf16.msra.mxu0 0
        %427 = vmatprep.subr.bf16.mxu0 0
        %428 = vmatpush1.bf16.msra.mxu0 0
        %429 = vmatprep.subr.bf16.mxu0 0
        %430 = vmatpush1.bf16.msra.mxu0 0
        %431 = vmatprep.subr.bf16.mxu0 0
        %432 = vmatpush1.bf16.msra.mxu0 0
        %433 = vmatprep.subr.bf16.mxu0 0
        %434 = vmatpush1.bf16.msra.mxu0 0
        %435 = vmatprep.subr.bf16.mxu0 0
        %436 = vmatpush1.bf16.msra.mxu0 0
        %437 = vmatprep.subr.bf16.mxu0 0
        %438 = vmatpush1.bf16.msra.mxu0 0
        %439 = vmatprep.subr.bf16.mxu0 0
        %440 = vmatpush1.bf16.msra.mxu0 0
        %441 = vmatprep.subr.bf16.mxu0 0
        %442 = vmatpush1.bf16.msra.mxu0 0
        %443 = vmatprep.subr.bf16.mxu0 0
        %444 = vmatpush1.bf16.msra.mxu0 0
        %445 = vmatprep.subr.bf16.mxu0 0
        %446 = vmatpush1.bf16.msra.mxu0 0
        %447 = vmatprep.mubr.bf16.mxu0 0
        %448 = vmatmul.mubr.bf16.gmra.mrb[0].mxu0 %v350
        %v449 = vpop.f32.mrb[0].mxu0
        %v450 = vadd.f32 %v401, %v449
        %v451 = vpop.f32.mrb[0].mxu0
        %v452 = vpop.f32.mrb[0].mxu0
        %v453 = vpop.f32.mrb[0].mxu0
        %454 = vdwg.mxu0
        %v455 = vld [vmem:[%s5] sm:$0xf]
        %v456 = vld [vmem:[%s5 + $0x4] sm:$0xf]
        %v457 = vld [vmem:[%s5 + $0x8] sm:$0xf]
        %v458 = vld [vmem:[%s5 + $0xc] sm:$0xf]
        %v459 = vld [vmem:[%s6] sm:$0x1]
        %v461 = vlaneseq
        %v462 = vshrl.u32 %v461, 7
        %v463 = vsub.s32 0, %v462
        %v464 = vrot.slane %v459, %v463
        %v470 = vunpack.c.l.b16 %v455
        %v471 = vunpack.c.l.b16 %v456
        %v472 = vunpack.c.l.b16 %v457
        %v473 = vunpack.c.l.b16 %v458
        %v474 = vpack.c.b16 %v471, %v470
        %v475 = vpack.c.b16 %v473, %v472
        %478 = vmatprep.subr.bf16.mxu0 0
        %479 = vmatpush1.bf16.msra.mxu0 %v474
        %480 = vmatprep.subr.bf16.mxu0 0
        %481 = vmatpush1.bf16.msra.mxu0 %v475
        %482 = vmatprep.subr.bf16.mxu0 0
        %483 = vmatpush1.bf16.msra.mxu0 0
        %484 = vmatprep.subr.bf16.mxu0 0
        %485 = vmatpush1.bf16.msra.mxu0 0
        %486 = vmatprep.subr.bf16.mxu0 0
        %487 = vmatpush1.bf16.msra.mxu0 0
        %488 = vmatprep.subr.bf16.mxu0 0
        %489 = vmatpush1.bf16.msra.mxu0 0
        %490 = vmatprep.subr.bf16.mxu0 0
        %491 = vmatpush1.bf16.msra.mxu0 0
        %492 = vmatprep.subr.bf16.mxu0 0
        %493 = vmatpush1.bf16.msra.mxu0 0
        %494 = vmatprep.subr.bf16.mxu0 0
        %495 = vmatpush1.bf16.msra.mxu0 0
        %496 = vmatprep.subr.bf16.mxu0 0
        %497 = vmatpush1.bf16.msra.mxu0 0
        %498 = vmatprep.subr.bf16.mxu0 0
        %499 = vmatpush1.bf16.msra.mxu0 0
        %500 = vmatprep.subr.bf16.mxu0 0
        %501 = vmatpush1.bf16.msra.mxu0 0
        %502 = vmatprep.subr.bf16.mxu0 0
        %503 = vmatpush1.bf16.msra.mxu0 0
        %504 = vmatprep.subr.bf16.mxu0 0
        %505 = vmatpush1.bf16.msra.mxu0 0
        %506 = vmatprep.subr.bf16.mxu0 0
        %507 = vmatpush1.bf16.msra.mxu0 0
        %508 = vmatprep.subr.bf16.mxu0 0
        %509 = vmatpush1.bf16.msra.mxu0 0
        %510 = vmatprep.mubr.bf16.mxu0 0
        %511 = vmatmul.mubr.bf16.gmra.mrb[0].mxu0 %v350
        %v512 = vpop.f32.mrb[0].mxu0
        %v513 = vadd.f32 %v464, %v512
        %v514 = vpop.f32.mrb[0].mxu0
        %v515 = vpop.f32.mrb[0].mxu0
        %v516 = vpop.f32.mrb[0].mxu0
        %517 = vdwg.mxu0
        %v518 = vpack.c.bf16 %v387, %v387
        %520 = vrot.lane.b32.xlu0 %v518, 112
        %v521 = vpop.permute.xlu0 %520
        %v522 = vpack.c.bf16 %v450, %v450
        %524 = vrot.lane.b32.xlu0 %v522, 112
        %v525 = vpop.permute.xlu0 %524
        %v526 = vpack.c.bf16 %v513, %v513
        %528 = vrot.lane.b32.xlu0 %v526, 112
        %v529 = vpop.permute.xlu0 %528
        %vm530 = vcmask 130048
        %v532 = vsel %vm530, %v518, 0
        %v535 = vsel %vm530, %v522, 0
        %537 = vmatprep.subr.bf16.mxu0 0
        %538 = vmatpush1.bf16.xpose.msra.mxu0 %v535
        %539 = vmatprep.subr.bf16.mxu0 0
        %540 = vmatpush1.bf16.xpose.msra.mxu0 0
        %541 = vmatprep.subr.bf16.mxu0 0
        %542 = vmatpush1.bf16.xpose.msra.mxu0 0
        %543 = vmatprep.subr.bf16.mxu0 0
        %544 = vmatpush1.bf16.xpose.msra.mxu0 0
        %545 = vmatprep.subr.bf16.mxu0 0
        %546 = vmatpush1.bf16.xpose.msra.mxu0 0
        %547 = vmatprep.subr.bf16.mxu0 0
        %548 = vmatpush1.bf16.xpose.msra.mxu0 0
        %549 = vmatprep.subr.bf16.mxu0 0
        %550 = vmatpush1.bf16.xpose.msra.mxu0 0
        %551 = vmatprep.subr.bf16.mxu0 0
        %552 = vmatpush1.bf16.xpose.msra.mxu0 0
        %553 = vmatprep.subr.bf16.mxu0 0
        %554 = vmatpush1.bf16.xpose.msra.mxu0 0
        %555 = vmatprep.subr.bf16.mxu0 0
        %556 = vmatpush1.bf16.xpose.msra.mxu0 0
        %557 = vmatprep.subr.bf16.mxu0 0
        %558 = vmatpush1.bf16.xpose.msra.mxu0 0
        %559 = vmatprep.subr.bf16.mxu0 0
        %560 = vmatpush1.bf16.xpose.msra.mxu0 0
        %561 = vmatprep.subr.bf16.mxu0 0
        %562 = vmatpush1.bf16.xpose.msra.mxu0 0
        %563 = vmatprep.subr.bf16.mxu0 0
        %564 = vmatpush1.bf16.xpose.msra.mxu0 0
        %565 = vmatprep.subr.bf16.mxu0 0
        %566 = vmatpush1.bf16.xpose.msra.mxu0 0
        %567 = vmatprep.subr.bf16.mxu0 0
        %568 = vmatpush1.bf16.xpose.msra.mxu0 0
        %569 = vmatprep.mubr.bf16.mxu0 0
        %570 = vmatmul.mubr.bf16.gmra.mrb[0].mxu0 %v532
        %v571 = vpop.f32.mrb[0].mxu0
        %v572 = vadd.f32 0.0, %v571
        %v573 = vpop.f32.mrb[0].mxu0
        %v574 = vpop.f32.mrb[0].mxu0
        %v575 = vpop.f32.mrb[0].mxu0
        %576 = vdwg.mxu0
        %v578 = vsel %vm530, %v521, 0
        %v581 = vsel %vm530, %v525, 0
        %583 = vmatprep.subr.bf16.mxu0 0
        %584 = vmatpush1.bf16.xpose.msra.mxu0 %v581
        %585 = vmatprep.subr.bf16.mxu0 0
        %586 = vmatpush1.bf16.xpose.msra.mxu0 0
        %587 = vmatprep.subr.bf16.mxu0 0
        %588 = vmatpush1.bf16.xpose.msra.mxu0 0
        %589 = vmatprep.subr.bf16.mxu0 0
        %590 = vmatpush1.bf16.xpose.msra.mxu0 0
        %591 = vmatprep.subr.bf16.mxu0 0
        %592 = vmatpush1.bf16.xpose.msra.mxu0 0
        %593 = vmatprep.subr.bf16.mxu0 0
        %594 = vmatpush1.bf16.xpose.msra.mxu0 0
        %595 = vmatprep.subr.bf16.mxu0 0
        %596 = vmatpush1.bf16.xpose.msra.mxu0 0
        %597 = vmatprep.subr.bf16.mxu0 0
        %598 = vmatpush1.bf16.xpose.msra.mxu0 0
        %599 = vmatprep.subr.bf16.mxu0 0
        %600 = vmatpush1.bf16.xpose.msra.mxu0 0
        %601 = vmatprep.subr.bf16.mxu0 0
        %602 = vmatpush1.bf16.xpose.msra.mxu0 0
        %603 = vmatprep.subr.bf16.mxu0 0
        %604 = vmatpush1.bf16.xpose.msra.mxu0 0
        %605 = vmatprep.subr.bf16.mxu0 0
        %606 = vmatpush1.bf16.xpose.msra.mxu0 0
        %607 = vmatprep.subr.bf16.mxu0 0
        %608 = vmatpush1.bf16.xpose.msra.mxu0 0
        %609 = vmatprep.subr.bf16.mxu0 0
        %610 = vmatpush1.bf16.xpose.msra.mxu0 0
        %611 = vmatprep.subr.bf16.mxu0 0
        %612 = vmatpush1.bf16.xpose.msra.mxu0 0
        %613 = vmatprep.subr.bf16.mxu0 0
        %614 = vmatpush1.bf16.xpose.msra.mxu0 0
        %615 = vmatprep.mubr.bf16.mxu0 0
        %616 = vmatmul.mubr.bf16.gmra.mrb[0].mxu0 %v578
        %v617 = vpop.f32.mrb[0].mxu0
        %v618 = vadd.f32 0.0, %v617
        %v619 = vpop.f32.mrb[0].mxu0
        %v620 = vpop.f32.mrb[0].mxu0
        %v621 = vpop.f32.mrb[0].mxu0
        %622 = vdwg.mxu0
        %vm623 = vcmask 64512
        %v624 = vsel %vm623, %v572, -inf
        %625 = vmax.xlane.f32.xlu0 %v624
        %v626 = vpop.xlane.xlu0 %625
        %v627 = vsel %vm623, %v618, -inf
        %628 = vmax.xlane.f32.xlu0 %v627
        %v629 = vpop.xlane.xlu0 %628
        %v630 = vsub.f32 %v572, %v626
        %v631 = vsub.f32 %v618, %v629
        %v632 = vmul.f32 %v630, 1.442695
        %v633 = vpow.pop %v632
        %v634 = vmul.f32 %v631, 1.442695
        %v635 = vpow.pop %v634
        %v636 = vsel %vm623, %v633, 0.0
        %637 = vadd.xlane.f32.xlu0 %v636
        %v638 = vpop.xlane.xlu0 %637
        %v639 = vsel %vm623, %v635, 0.0
        %640 = vadd.xlane.f32.xlu0 %v639
        %v641 = vpop.xlane.xlu0 %640
        %v642 = vpack.c.bf16 %v633, %v633
        %v643 = vpack.c.bf16 %v635, %v635
        %v645 = vsel %vm623, %v642, 0
        %vm647 = vcmask 1043456
        %v649 = vsel %vm647, %v526, 0
        %651 = vmatprep.subr.bf16.mxu0 0
        %652 = vmatpush1.bf16.msra.mxu0 %v649
        %653 = vmatprep.subr.bf16.mxu0 0
        %654 = vmatpush1.bf16.msra.mxu0 0
        %655 = vmatprep.subr.bf16.mxu0 0
        %656 = vmatpush1.bf16.msra.mxu0 0
        %657 = vmatprep.subr.bf16.mxu0 0
        %658 = vmatpush1.bf16.msra.mxu0 0
        %659 = vmatprep.subr.bf16.mxu0 0
        %660 = vmatpush1.bf16.msra.mxu0 0
        %661 = vmatprep.subr.bf16.mxu0 0
        %662 = vmatpush1.bf16.msra.mxu0 0
        %663 = vmatprep.subr.bf16.mxu0 0
        %664 = vmatpush1.bf16.msra.mxu0 0
        %665 = vmatprep.subr.bf16.mxu0 0
        %666 = vmatpush1.bf16.msra.mxu0 0
        %667 = vmatprep.subr.bf16.mxu0 0
        %668 = vmatpush1.bf16.msra.mxu0 0
        %669 = vmatprep.subr.bf16.mxu0 0
        %670 = vmatpush1.bf16.msra.mxu0 0
        %671 = vmatprep.subr.bf16.mxu0 0
        %672 = vmatpush1.bf16.msra.mxu0 0
        %673 = vmatprep.subr.bf16.mxu0 0
        %674 = vmatpush1.bf16.msra.mxu0 0
        %675 = vmatprep.subr.bf16.mxu0 0
        %676 = vmatpush1.bf16.msra.mxu0 0
        %677 = vmatprep.subr.bf16.mxu0 0
        %678 = vmatpush1.bf16.msra.mxu0 0
        %679 = vmatprep.subr.bf16.mxu0 0
        %680 = vmatpush1.bf16.msra.mxu0 0
        %681 = vmatprep.subr.bf16.mxu0 0
        %682 = vmatpush1.bf16.msra.mxu0 0
        %683 = vmatprep.mubr.bf16.mxu0 0
        %684 = vmatmul.mubr.bf16.gmra.mrb[0].mxu0 %v645
        %v685 = vpop.f32.mrb[0].mxu0
        %v686 = vadd.f32 0.0, %v685
        %v687 = vpop.f32.mrb[0].mxu0
        %v688 = vpop.f32.mrb[0].mxu0
        %v689 = vpop.f32.mrb[0].mxu0
        %690 = vdwg.mxu0
        %v692 = vsel %vm623, %v643, 0
        %v695 = vsel %vm647, %v529, 0
        %697 = vmatprep.subr.bf16.mxu0 0
        %698 = vmatpush1.bf16.msra.mxu0 %v695
        %699 = vmatprep.subr.bf16.mxu0 0
        %700 = vmatpush1.bf16.msra.mxu0 0
        %701 = vmatprep.subr.bf16.mxu0 0
        %702 = vmatpush1.bf16.msra.mxu0 0
        %703 = vmatprep.subr.bf16.mxu0 0
        %704 = vmatpush1.bf16.msra.mxu0 0
        %705 = vmatprep.subr.bf16.mxu0 0
        %706 = vmatpush1.bf16.msra.mxu0 0
        %707 = vmatprep.subr.bf16.mxu0 0
        %708 = vmatpush1.bf16.msra.mxu0 0
        %709 = vmatprep.subr.bf16.mxu0 0
        %710 = vmatpush1.bf16.msra.mxu0 0
        %711 = vmatprep.subr.bf16.mxu0 0
        %712 = vmatpush1.bf16.msra.mxu0 0
        %713 = vmatprep.subr.bf16.mxu0 0
        %714 = vmatpush1.bf16.msra.mxu0 0
        %715 = vmatprep.subr.bf16.mxu0 0
        %716 = vmatpush1.bf16.msra.mxu0 0
        %717 = vmatprep.subr.bf16.mxu0 0
        %718 = vmatpush1.bf16.msra.mxu0 0
        %719 = vmatprep.subr.bf16.mxu0 0
        %720 = vmatpush1.bf16.msra.mxu0 0
        %721 = vmatprep.subr.bf16.mxu0 0
        %722 = vmatpush1.bf16.msra.mxu0 0
        %723 = vmatprep.subr.bf16.mxu0 0
        %724 = vmatpush1.bf16.msra.mxu0 0
        %725 = vmatprep.subr.bf16.mxu0 0
        %726 = vmatpush1.bf16.msra.mxu0 0
        %727 = vmatprep.subr.bf16.mxu0 0
        %728 = vmatpush1.bf16.msra.mxu0 0
        %729 = vmatprep.mubr.bf16.mxu0 0
        %730 = vmatmul.mubr.bf16.gmra.mrb[0].mxu0 %v692
        %v731 = vpop.f32.mrb[0].mxu0
        %v732 = vadd.f32 0.0, %v731
        %v733 = vpop.f32.mrb[0].mxu0
        %v734 = vpop.f32.mrb[0].mxu0
        %v735 = vpop.f32.mrb[0].mxu0
        %736 = vdwg.mxu0
        %v737 = vrcp.pop %v638
        %v738 = vrcp.pop %v641
        %v739 = vmul.f32 %v686, %v737
        %v740 = vmul.f32 %v732, %v738
        %741 = vst.msk [vmem:[%s322] sm:$0xff] %vm530, %v739
        %743 = vrot.lane.b32.xlu0 %v740, 16
        %v744 = vpop.permute.xlu0 %743
        %vm746 = vcmask 261248
        %747 = vst.msk [vmem:[%s322] sm:$0xff] %vm746, %v744
        %s748 = sand.u32 %s185, 1
        %s749 = scalar_lea.sflag [#allocation4], %s748
        %s750 = sand.u32 %s185, 1
        %s751 = smul.addr %s750, 8
        %s752 = scalar_lea.vmem [#allocation8], %s751
        // Predicated region
        $region61: #{tpu_custom_call.1} parent=47 // pred_check
          %p753 = pneg %p195
        $region62: #{tpu_custom_call.1} parent=47 // pred_check_branch
          %755 = sbr.rel (%p753) target = $region64
        $region63: #{tpu_custom_call.1} parent=47 // pred_region
          %s757 = ssub.s32 128, 128
          %758 = vsyncadd %s749, %s757
          %s759 = smul.addr %s25, 128
          %s760 = scalar_lea.hbm %s7, %s759
          %s762 = sshll.u32 %s752, 4
          %s763 = int_to_ptr.vmem [resolvable:$true] %s762
          %765 = dma.vmem_to_hbm [thread:$0]  %s763, 128, %s760, %s749
        $region64: #{tpu_custom_call.1} parent=47 // pred_fallthru
          _
      $region48: #{tpu_custom_call.1} parent=5 // pred_fallthru
        _
      %p766 = scmp.le.s32.totalorder 2, %s20
      // Predicated region
      $region65: #{tpu_custom_call.1} parent=5 // pred_check
        %p767 = pneg %p766
      $region66: #{tpu_custom_call.1} parent=5 // pred_check_branch
        %769 = sbr.rel (%p767) target = $region68
      $region67: #{tpu_custom_call.1} parent=5 // pred_region
        %s770 = ssub.s32 %s20, 2
        // Predicated region
        $region69: #{tpu_custom_call.1} parent=67 // pred_check
          %p771 = pneg %p201
        $region70: #{tpu_custom_call.1} parent=67 // pred_check_branch
          %773 = sbr.rel (%p771) target = $region72
        $region71: #{tpu_custom_call.1} parent=67 // pred_region
          %s774 = sand.u32 %s186, 1
          %s775 = scalar_lea.sflag [#allocation4], %s774
          %s776 = sand.u32 %s186, 1
          %s777 = smul.addr %s776, 8
          %s778 = scalar_lea.vmem [#allocation8], %s777
          %779 = dma.done %s775, 128
        $region72: #{tpu_custom_call.1} parent=67 // pred_fallthru
          _
      $region68: #{tpu_custom_call.1} parent=5 // pred_fallthru
        _
    $region6: #{tpu_custom_call.1} parent=1 // loop_footer
      %s24 = sadd.s32 1, %s20
    $region7: #{tpu_custom_call.1} parent=1 // loop_footer_branch
      %19 = sbr.rel target = $region3
    $region8: #{tpu_custom_call.1} parent=1 // loop_exit
      _
    %780 = vsyncpa [#allocation3], 1
    %s781 = scalar_lea.sflag [#allocation3], 1
    %782 = vsyncpa %s781, 1
    %783 = vsyncpa [#allocation6], 1
    %784 = vsyncpa [#allocation4], 1
    %s785 = scalar_lea.sflag [#allocation4], 1
    %786 = vsyncpa %s785, 1

</llo_original>
